<compile_context>
chip_gen: v7x
topology: tpu7x:2x2x1
jax: 0.10.0
libtpu: 0.0.40
codegen_flags: <defaults>
</compile_context>

<pallas_src>
import numpy as np
import jax
import jax.numpy as jnp
from jax.experimental import pallas as pl
from jax.experimental.pallas import tpu as pltpu

# ---- config mirroring Arguments(): n_qubits=2, m=2 -> 4 wires, 16-dim state ----
N_QUBITS = 2
M = 2
N_WIRES = N_QUBITS * M
DIM = 2 ** N_WIRES          # 16
PACKED = 2 * DIM            # 32 : [real; imag] stacked on sublanes


# ----------------------------- Pallas kernel ---------------------------------
def hybrid_kernel(x_ref, w_ref, zw_ref, b_ref, out_ref):
    # x_ref : (32, Bt)  packed [real; imag] states, batch on lanes
    # w_ref : (32, 32)  block-real form of the circuit unitary (resident)
    # zw_ref: (16, 1)   zsigns @ fc_weight (folded classifier, resident)
    # b_ref : (1, 1)    classifier bias, scalar in SMEM
    # out   : (1, Bt)   sigmoid(logits), lane-dense
    y = jnp.dot(w_ref[...], x_ref[...], preferred_element_type=jnp.float32)
    yr = y[:DIM, :]                                   # (16, Bt) real part
    yi = y[DIM:, :]                                   # (16, Bt) imag part
    probs = yr * yr + yi * yi                         # |psi'|^2, (16, Bt)
    # <Z_i> contraction folded with Linear weight: logits = sum_k zw[k]*probs[k,:]
    logits = jnp.sum(probs * zw_ref[...], axis=0, keepdims=True) + b_ref[0, 0]
    out_ref[...] = jax.nn.sigmoid(logits)             # (1, Bt)


def hybrid_forward(psi_r, psi_i, w_block, zw, b, *, bt=128):
    """psi_r/psi_i: (B, 16) float32. Returns (B, 1) sigmoid outputs."""
    B = psi_r.shape[0]
    # Pack to batch-on-lanes layout and pad batch to the tile multiple.
    x = jnp.concatenate([psi_r.T, psi_i.T], axis=0)   # (32, B)
    b_pad = pl.cdiv(B, bt) * bt
    if b_pad != B:
        x = jnp.pad(x, ((0, 0), (0, b_pad - B)))      # zero rows -> harmless
    grid = (b_pad // bt,)
    # TODO(synk): for large-batch v6e throughput, cast x/w_block to bfloat16 for
    # the MXU (keep the elementwise tail in f32) and bump bt to >=512.
    out = pl.pallas_call(
        hybrid_kernel,
        out_shape=jax.ShapeDtypeStruct((1, b_pad), jnp.float32),
        grid_spec=pltpu.PrefetchScalarGridSpec(
            num_scalar_prefetch=0,
            grid=grid,
            in_specs=[
                pl.BlockSpec((PACKED, bt), lambda i: (0, i)),        # states
                pl.BlockSpec((PACKED, PACKED), lambda i: (0, 0)),    # resident W
                pl.BlockSpec((DIM, 1), lambda i: (0, 0)),            # resident zw
                pl.BlockSpec(memory_space=pltpu.MemorySpace.SMEM),   # bias scalar
            ],
            out_specs=pl.BlockSpec((1, bt), lambda i: (0, i)),
        ),
        compiler_params=pltpu.CompilerParams(
            dimension_semantics=("parallel",)),        # 2 TCs on v7x share batch
    )(x, w_block, zw, b)
    return out[:, :B].T                               # (B, 1)


# ---------------------- host-side circuit construction -----------------------
def _kron_list(mats):
    out = np.array([[1.0 + 0.0j]], dtype=np.complex64)
    for m_ in mats:
        out = np.kron(out, m_)
    return out


def _single_qubit_full(gate, wire, n_wires):
    mats = [np.eye(2, dtype=np.complex64) for _ in range(n_wires)]
    mats[wire] = gate.astype(np.complex64)
    return _kron_list(mats)


def _cnot_full(control, target, n_wires):
    # adjacent control < target (as in qcnn: CNOT(2i, 2i+1))
    cnot = np.array([[1, 0, 0, 0],
                     [0, 1, 0, 0],
                     [0, 0, 0, 1],
                     [0, 0, 1, 0]], dtype=np.complex64)
    left = np.eye(2 ** control, dtype=np.complex64)
    right = np.eye(2 ** (n_wires - target - 1), dtype=np.complex64)
    return np.kron(np.kron(left, cnot), right)


def _rx(theta):
    c, s = np.cos(theta / 2.0), np.sin(theta / 2.0)
    return np.array([[c, -1j * s], [-1j * s, c]], dtype=np.complex64)


def _ry(theta):
    c, s = np.cos(theta / 2.0), np.sin(theta / 2.0)
    return np.array([[c, -s], [s, c]], dtype=np.complex64)


_H = (1.0 / np.sqrt(2.0)) * np.array([[1, 1], [1, -1]], dtype=np.complex64)


def build_circuit_unitary(params):
    """Unitary of qcnn for given trainable params (shape (2*N_WIRES,))."""
    n = N_WIRES
    U = np.eye(DIM, dtype=np.complex64)
    for i in range(n):                       # RX then RY on every wire
        U = _single_qubit_full(_rx(params[i]), i, n) @ U
        U = _single_qubit_full(_ry(params[i + n]), i, n) @ U
    for i in range(n // 2):                  # CNOT(2i,2i+1) then H(2i)
        U = _cnot_full(2 * i, 2 * i + 1, n) @ U
        U = _single_qubit_full(_H, 2 * i, n) @ U
    return U


def build_zsigns():
    """zsigns[k, i] = eigenvalue of Z_i on basis state k (wire 0 = MSB)."""
    z = np.zeros((DIM, N_WIRES), dtype=np.float32)
    for k in range(DIM):
        for i in range(N_WIRES):
            bit = (k >> (N_WIRES - 1 - i)) & 1
            z[k, i] = 1.0 - 2.0 * bit
    return z


def build_block_unitary(U):
    """Real block form: [[Re U, -Im U], [Im U, Re U]] acting on [re; im] columns."""
    Ur = U.real.astype(np.float32)
    Ui = U.imag.astype(np.float32)
    return np.block([[Ur, -Ui], [Ui, Ur]]).astype(np.float32)   # (32, 32)


# ------------------------------- reference -----------------------------------
def reference_forward(psi_r, psi_i, U, zsigns, w, b):
    psi = psi_r.astype(np.complex64) + 1j * psi_i.astype(np.complex64)
    psi_out = psi @ U.T
    probs = np.abs(psi_out) ** 2
    expvals = probs @ zsigns                       # (B, N_WIRES), real
    logits = expvals @ np.asarray(w) + np.asarray(b)
    return 1.0 / (1.0 + np.exp(-logits))


# --------------------------------- main ---------------------------------------
if __name__ == "__main__":
    key = jax.random.PRNGKey(0)
    k1, k2, k3, k4, k5 = jax.random.split(key, 5)
    B = 2

    # Quantum-layer trainable params (TorchLayer default: uniform in [0, 2pi))
    qparams = np.asarray(
        jax.random.uniform(k1, (2 * N_WIRES,), minval=0.0, maxval=2.0 * np.pi)
    )

    # Classifier Linear(N_WIRES, 1): uniform(-1/sqrt(fan_in), 1/sqrt(fan_in))
    bound = 1.0 / np.sqrt(N_WIRES)
    fc_w = jax.random.uniform(k2, (1, N_WIRES), minval=-bound, maxval=bound,
                              dtype=jnp.float32)
    fc_b = jax.random.uniform(k3, (1,), minval=-bound, maxval=bound,
                              dtype=jnp.float32)

    # Batch of normalized complex state vectors (the module's input x)
    re = jax.random.normal(k4, (B, DIM), dtype=jnp.float32)
    im = jax.random.normal(k5, (B, DIM), dtype=jnp.float32)
    norm = jnp.sqrt(jnp.sum(re * re + im * im, axis=1, keepdims=True))
    psi_r = re / norm
    psi_i = im / norm

    # Host-side parameter setup (glue): dense circuit unitary in block-real form,
    # folded classifier vector zw = zsigns @ w, scalar bias.
    U = build_circuit_unitary(qparams)
    w_block = jnp.asarray(build_block_unitary(U))               # (32, 32)
    zsigns = build_zsigns()                                     # (16, 4)
    w_col = np.asarray(fc_w).T.astype(np.float32)               # (4, 1)
    zw = jnp.asarray(zsigns @ w_col)                            # (16, 1)
    b = jnp.asarray(fc_b, jnp.float32).reshape(1, 1)            # (1, 1) -> SMEM

    out = hybrid_forward(psi_r, psi_i, w_block, zw, b, bt=128)
    out = jax.block_until_ready(out)

    ref = reference_forward(np.asarray(psi_r), np.asarray(psi_i), U,
                            zsigns, w_col, np.asarray(fc_b))
    assert out.shape == (B, 1)
    assert np.allclose(np.asarray(out), ref, rtol=1e-4, atol=1e-5)

    print("KERNEL_OK")
</pallas_src>

<mosaic_0001>
module attributes {stable_mosaic.version = 11 : i64} {
  func.func @hybrid_kernel(%arg0: i32, %arg1: memref<32x128xf32, #tpu.memory_space<vmem>>, %arg2: memref<32x32xf32, #tpu.memory_space<vmem>>, %arg3: memref<16x1xf32, #tpu.memory_space<vmem>>, %arg4: memref<1x1xf32, #tpu.memory_space<smem>>, %arg5: memref<1x128xf32, #tpu.memory_space<vmem>>) attributes {dimension_semantics = [#tpu.dimension_semantics<parallel>], iteration_bounds = array<i64: 1>, scalar_prefetch = 0 : i64, scratch_operands = 0 : i64, tpu.core_type = #tpu.core_type<tc>, window_params = [{transform_indices = @transform_0, window_bounds = array<i64: 32, 128>}, {pipeline_mode = #tpu.pipeline_mode<synchronous>, transform_indices = @transform_1, window_bounds = array<i64: 32, 32>}, {pipeline_mode = #tpu.pipeline_mode<synchronous>, transform_indices = @transform_2, window_bounds = array<i64: 16, 1>}, {transform_indices = @transform_3, window_bounds = array<i64: 1, 1>}, {transform_indices = @transform_4, window_bounds = array<i64: 1, 128>}]} {
    %c0 = arith.constant 0 : index
    %c0_0 = arith.constant 0 : index
    %0 = vector.load %arg2[%c0, %c0_0] : memref<32x32xf32, #tpu.memory_space<vmem>>, vector<32x32xf32>
    %c0_1 = arith.constant 0 : index
    %c0_2 = arith.constant 0 : index
    %1 = vector.load %arg1[%c0_1, %c0_2] : memref<32x128xf32, #tpu.memory_space<vmem>>, vector<32x128xf32>
    %cst = arith.constant dense<0.000000e+00> : vector<32x128xf32>
    %2 = tpu.matmul %0, %1, %cst {dimension_numbers = #tpu.dot_dimension_numbers<[1], [0], [0], [1], [0, 0, 1, 1], [], []>} : vector<32x32xf32>, vector<32x128xf32>, vector<32x128xf32> -> vector<32x128xf32>
    %3 = vector.extract_strided_slice %2 {offsets = [0, 0], sizes = [16, 128], strides = [1, 1]} : vector<32x128xf32> to vector<16x128xf32>
    %4 = vector.extract_strided_slice %2 {offsets = [16, 0], sizes = [16, 128], strides = [1, 1]} : vector<32x128xf32> to vector<16x128xf32>
    %5 = arith.mulf %3, %3 : vector<16x128xf32>
    %6 = arith.mulf %4, %4 : vector<16x128xf32>
    %7 = arith.addf %5, %6 : vector<16x128xf32>
    %c0_3 = arith.constant 0 : index
    %c0_4 = arith.constant 0 : index
    %8 = vector.load %arg3[%c0_3, %c0_4] : memref<16x1xf32, #tpu.memory_space<vmem>>, vector<16x1xf32>
    %9 = vector.broadcast %8 : vector<16x1xf32> to vector<16x128xf32>
    %10 = arith.mulf %7, %9 : vector<16x128xf32>
    %cst_5 = arith.constant dense<0.000000e+00> : vector<128xf32>
    %11 = vector.multi_reduction <add>, %10, %cst_5 [0] : vector<16x128xf32> to vector<128xf32>
    %12 = vector.shape_cast %11 : vector<128xf32> to vector<1x128xf32>
    %c0_6 = arith.constant 0 : index
    %c0_7 = arith.constant 0 : index
    %13 = memref.load %arg4[%c0_6, %c0_7] : memref<1x1xf32, #tpu.memory_space<smem>>
    %14 = vector.broadcast %13 : f32 to vector<1x128xf32>
    %15 = arith.addf %12, %14 : vector<1x128xf32>
    %16 = arith.negf %15 : vector<1x128xf32>
    %17 = math.exp %16 : vector<1x128xf32>
    %cst_8 = arith.constant 1.000000e+00 : f32
    %18 = vector.broadcast %cst_8 : f32 to vector<1x128xf32>
    %19 = arith.addf %18, %17 : vector<1x128xf32>
    %20 = arith.divf %18, %19 : vector<1x128xf32>
    %c0_9 = arith.constant 0 : index
    %c0_10 = arith.constant 0 : index
    %21 = vector.load %arg5[%c0_9, %c0_10] : memref<1x128xf32, #tpu.memory_space<vmem>>, vector<1x128xf32>
    tpu.vector_store %arg5[%c0_9, %c0_10], %20 {strides = array<i32>} : memref<1x128xf32, #tpu.memory_space<vmem>>, vector<1x128xf32>,
    return
  }
  func.func @transform_0(%arg0: i32) -> (i32, i32) {
    %c0_i32 = arith.constant 0 : i32
    %c0_i32_0 = arith.constant 0 : i32
    return %c0_i32, %arg0 : i32, i32
  }
  func.func @transform_1(%arg0: i32) -> (i32, i32) {
    %c0_i32 = arith.constant 0 : i32
    %c0_i32_0 = arith.constant 0 : i32
    %c0_i32_1 = arith.constant 0 : i32
    return %c0_i32, %c0_i32_0 : i32, i32
  }
  func.func @transform_2(%arg0: i32) -> (i32, i32) {
    %c0_i32 = arith.constant 0 : i32
    %c0_i32_0 = arith.constant 0 : i32
    %c0_i32_1 = arith.constant 0 : i32
    return %c0_i32, %c0_i32_0 : i32, i32
  }
  func.func @transform_3(%arg0: i32) -> (i32, i32) {
    %c0_i32 = arith.constant 0 : i32
    %c0_i32_0 = arith.constant 0 : i32
    %c0_i32_1 = arith.constant 0 : i32
    return %c0_i32, %c0_i32_0 : i32, i32
  }
  func.func @transform_4(%arg0: i32) -> (i32, i32) {
    %c0_i32 = arith.constant 0 : i32
    %c0_i32_0 = arith.constant 0 : i32
    return %c0_i32, %arg0 : i32, i32
  }
}

</mosaic_0001>

<llo_original>
// kernel: tpu_custom_call.1
$region0: #{tpu_custom_call.1}
  #allocation0 [shape = 'u32[]', space=smem, size = 0x4, offset = 0x4, fixed_abs, tag = 'smem constant byte address 0x4 - core index']
  #allocation1 [shape = 'u32[144,128]{1,0:T(1,128)}', space=vmem, size = 0x12000, scoped, tag = 'internal scratch']
  #allocation2 [shape = 'f32[1,1]{1,0:T(1,128)S(6)}', space=smem, size = 0x200, scoped, tag = 'scoped memory for tpu_custom_call.1']
  %s0 = inlined_call_operand.hbm [shape: f32[32,128], index: 0, kind: input, shape index: {}]
  %s1 = inlined_call_operand.hbm [shape: f32[32,32], index: 1, kind: input, shape index: {}]
  %s2 = inlined_call_operand.vmem [shape: f32[16,1], index: 2, kind: input, shape index: {}]
  %s3 = inlined_call_operand.<no memory space> [shape: f32[1,1], index: 3, kind: input, shape index: {}]
  %s4 = inlined_call_operand.hbm [shape: f32[1,128], index: 4, kind: output, shape index: {}]
  %s5 = sld [smem:[#allocation0]]
  $region34: #{tpu_custom_call.1} parent=0
    _
  %s7 = ssub.s32 1, %s5
  %s8 = scalar_select 0, %s7, %s5
  %9 = sst [smem:[#allocation2]] %s3
  $region1: #{tpu_custom_call.1} parent=0
    #allocation3 [shape = 'u8[16384]{0}', space=vmem, size = 0x4000, scoped, tag = 'input window, operand 0, single buffered']
    #allocation4 [shape = 's32[1]{0}', space=sflag, size = 0x4, scoped, tag = 'scoped memory for tpu_custom_call.1']
    #allocation5 [shape = 's32[1]{0}', space=sflag, size = 0x4, scoped, tag = 'scoped memory for tpu_custom_call.1']
    #allocation6 [shape = 'u8[16384]{0}', space=vmem, size = 0x4000, scoped, tag = 'input window, operand 1, single buffered']
    #allocation7 [shape = 's32[1]{0}', space=sflag, size = 0x4, scoped, tag = 'scoped memory for tpu_custom_call.1']
    #allocation8 [shape = 'u8[512]{0}', space=vmem, size = 0x400, scoped, tag = 'output window, operand 0, single buffered']
    %10 = vsyncpa [#allocation4], 0
    %11 = vsyncpa [#allocation7], 0
    %12 = vsyncpa [#allocation5], 0
    // Predicated region
    $region2: #{tpu_custom_call.1} parent=1 // pred_check
      _
    $region3: #{tpu_custom_call.1} parent=1 // pred_check_branch
      %14 = sbr.rel (0) target = $region5
    $region4: #{tpu_custom_call.1} parent=1 // pred_region
      %s16 = ssub.s32 512, 512
      %17 = vsyncadd [#allocation4], %s16
      %s18 = sshll.u32 [#allocation3], 4
      %s19 = int_to_ptr.vmem [resolvable:$true] %s18
      %24 = dma.hbm_to_vmem [thread:$0]  %s0, 512, %s19, [#allocation4], 128, 128, 8
    $region5: #{tpu_custom_call.1} parent=1 // pred_fallthru
      _
    // Predicated region
    $region6: #{tpu_custom_call.1} parent=1 // pred_check
      _
    $region7: #{tpu_custom_call.1} parent=1 // pred_check_branch
      %26 = sbr.rel (0) target = $region9
    $region8: #{tpu_custom_call.1} parent=1 // pred_region
      %s28 = ssub.s32 512, 512
      %29 = vsyncadd [#allocation7], %s28
      %s30 = sshll.u32 [#allocation6], 4
      %s31 = int_to_ptr.vmem [resolvable:$true] %s30
      %36 = dma.hbm_to_vmem [thread:$0]  %s1, 512, %s31, [#allocation7], 128, 128, 8
    $region9: #{tpu_custom_call.1} parent=1 // pred_fallthru
      _
    // Predicated region
    $region10: #{tpu_custom_call.1} parent=1 // pred_check
      _
    $region11: #{tpu_custom_call.1} parent=1 // pred_check_branch
      %38 = sbr.rel (0) target = $region13
    $region12: #{tpu_custom_call.1} parent=1 // pred_region
      _
    $region13: #{tpu_custom_call.1} parent=1 // pred_fallthru
      _
    // Predicated region
    $region14: #{tpu_custom_call.1} parent=1 // pred_check
      _
    $region15: #{tpu_custom_call.1} parent=1 // pred_check_branch
      %40 = sbr.rel (0) target = $region17
    $region16: #{tpu_custom_call.1} parent=1 // pred_region
      _
    $region17: #{tpu_custom_call.1} parent=1 // pred_fallthru
      _
    // Predicated region
    $region18: #{tpu_custom_call.1} parent=1 // pred_check
      _
    $region19: #{tpu_custom_call.1} parent=1 // pred_check_branch
      %42 = sbr.rel (0) target = $region21
    $region20: #{tpu_custom_call.1} parent=1 // pred_region
      %43 = dma.done [#allocation4], 512
    $region21: #{tpu_custom_call.1} parent=1 // pred_fallthru
      _
    // Predicated region
    $region22: #{tpu_custom_call.1} parent=1 // pred_check
      _
    $region23: #{tpu_custom_call.1} parent=1 // pred_check_branch
      %45 = sbr.rel (0) target = $region25
    $region24: #{tpu_custom_call.1} parent=1 // pred_region
      %46 = dma.done [#allocation7], 512
    $region25: #{tpu_custom_call.1} parent=1 // pred_fallthru
      _
    %v47 = vld [vmem:[#allocation6] sm:$0xff]
    %v48 = vld [vmem:[#allocation6 + $0x8] sm:$0xff]
    %v49 = vld [vmem:[#allocation6 + $0x10] sm:$0xff]
    %v50 = vld [vmem:[#allocation6 + $0x18] sm:$0xff]
    %v51 = vld [vmem:[#allocation3] sm:$0xff]
    %v52 = vld [vmem:[#allocation3 + $0x8] sm:$0xff]
    %v53 = vld [vmem:[#allocation3 + $0x10] sm:$0xff]
    %v54 = vld [vmem:[#allocation3 + $0x18] sm:$0xff]
    %vm55 = vcmask 261120
    %v57 = vsel %vm55, %v47, 0
    %v60 = vsel %vm55, %v48, 0
    %v63 = vsel %vm55, %v49, 0
    %v66 = vsel %vm55, %v50, 0
    %68 = vmatprep.subr.mxu0 0.0
    %69 = vmatpush1.msra.mxu0 %v51
    %70 = vmatprep.subr.mxu0 0.0
    %71 = vmatpush1.msra.mxu0 %v52
    %72 = vmatprep.subr.mxu0 0.0
    %73 = vmatpush1.msra.mxu0 %v53
    %74 = vmatprep.subr.mxu0 0.0
    %75 = vmatpush1.msra.mxu0 %v54
    %76 = vmatprep.subr.mxu0 0.0
    %77 = vmatpush1.msra.mxu0 0.0
    %78 = vmatprep.subr.mxu0 0.0
    %79 = vmatpush1.msra.mxu0 0.0
    %80 = vmatprep.subr.mxu0 0.0
    %81 = vmatpush1.msra.mxu0 0.0
    %82 = vmatprep.subr.mxu0 0.0
    %83 = vmatpush1.msra.mxu0 0.0
    %84 = vmatprep.subr.mxu0 0.0
    %85 = vmatpush1.msra.mxu0 0.0
    %86 = vmatprep.subr.mxu0 0.0
    %87 = vmatpush1.msra.mxu0 0.0
    %88 = vmatprep.subr.mxu0 0.0
    %89 = vmatpush1.msra.mxu0 0.0
    %90 = vmatprep.subr.mxu0 0.0
    %91 = vmatpush1.msra.mxu0 0.0
    %92 = vmatprep.subr.mxu0 0.0
    %93 = vmatpush1.msra.mxu0 0.0
    %94 = vmatprep.subr.mxu0 0.0
    %95 = vmatpush1.msra.mxu0 0.0
    %96 = vmatprep.subr.mxu0 0.0
    %97 = vmatpush1.msra.mxu0 0.0
    %98 = vmatprep.subr.mxu0 0.0
    %99 = vmatpush1.msra.mxu0 0.0
    %100 = vmatprep.subr.mxu0 0.0
    %101 = vmatpush1.msra.mxu0 0.0
    %102 = vmatprep.subr.mxu0 0.0
    %103 = vmatpush1.msra.mxu0 0.0
    %104 = vmatprep.subr.mxu0 0.0
    %105 = vmatpush1.msra.mxu0 0.0
    %106 = vmatprep.subr.mxu0 0.0
    %107 = vmatpush1.msra.mxu0 0.0
    %108 = vmatprep.subr.mxu0 0.0
    %109 = vmatpush1.msra.mxu0 0.0
    %110 = vmatprep.subr.mxu0 0.0
    %111 = vmatpush1.msra.mxu0 0.0
    %112 = vmatprep.subr.mxu0 0.0
    %113 = vmatpush1.msra.mxu0 0.0
    %114 = vmatprep.subr.mxu0 0.0
    %115 = vmatpush1.msra.mxu0 0.0
    %116 = vmatprep.subr.mxu0 0.0
    %117 = vmatpush1.msra.mxu0 0.0
    %118 = vmatprep.subr.mxu0 0.0
    %119 = vmatpush1.msra.mxu0 0.0
    %120 = vmatprep.subr.mxu0 0.0
    %121 = vmatpush1.msra.mxu0 0.0
    %122 = vmatprep.subr.mxu0 0.0
    %123 = vmatpush1.msra.mxu0 0.0
    %124 = vmatprep.subr.mxu0 0.0
    %125 = vmatpush1.msra.mxu0 0.0
    %126 = vmatprep.subr.mxu0 0.0
    %127 = vmatpush1.msra.mxu0 0.0
    %128 = vmatprep.subr.mxu0 0.0
    %129 = vmatpush1.msra.mxu0 0.0
    %130 = vmatprep.subr.mxu0 0.0
    %131 = vmatpush1.msra.mxu0 0.0
    %132 = vmatprep.mubr.f32.mxu0 0.0
    %133 = vmatmul.mubr.f32.gmra.mrb[0].mxu0 %v57
    %v134 = vpop.f32.mrb[0].mxu0
    %v135 = vadd.f32 0.0, %v134
    %v136 = vpop.f32.mrb[0].mxu0
    %137 = vmatprep.mubr.f32.mxu0 0.0
    %138 = vmatmul.mubr.f32.gmra.mrb[0].mxu0 %v60
    %v139 = vpop.f32.mrb[0].mxu0
    %v140 = vadd.f32 0.0, %v139
    %v141 = vpop.f32.mrb[0].mxu0
    %142 = vmatprep.mubr.f32.mxu0 0.0
    %143 = vmatmul.mubr.f32.gmra.mrb[0].mxu0 %v63
    %v144 = vpop.f32.mrb[0].mxu0
    %v145 = vadd.f32 0.0, %v144
    %v146 = vpop.f32.mrb[0].mxu0
    %147 = vmatprep.mubr.f32.mxu0 0.0
    %148 = vmatmul.mubr.f32.gmra.mrb[0].mxu0 %v66
    %v149 = vpop.f32.mrb[0].mxu0
    %v150 = vadd.f32 0.0, %v149
    %v151 = vpop.f32.mrb[0].mxu0
    %152 = vdwg.mxu0
    %v153 = vmul.f32 %v135, %v135
    %v154 = vmul.f32 %v140, %v140
    %v155 = vmul.f32 %v145, %v145
    %v156 = vmul.f32 %v150, %v150
    %v157 = vadd.f32 %v153, %v155
    %v158 = vadd.f32 %v154, %v156
    %v159 = vld [vmem:[%s2] sm:$0xff]
    %v160 = vld [vmem:[%s2 + $0x8] sm:$0xff]
    %162 = vset.pattern.permute.xlu0 0
    %163 = vperm.xlu0 %162, %v159
    %v164 = vpop.permute.xlu0 %163
    %167 = vset.pattern.permute.xlu0 0
    %168 = vperm.xlu0 %167, %v160
    %v169 = vpop.permute.xlu0 %168
    %v171 = vmul.f32 %v157, %v164
    %v172 = vmul.f32 %v158, %v169
    %v173 = vadd.f32 %v171, %v172
    %v174 = vrot.slane %v173, 4
    %v175 = vadd.f32 %v173, %v174
    %v176 = vrot.slane %v175, 2
    %v177 = vadd.f32 %v175, %v176
    %v178 = vrot.slane %v177, 1
    %v179 = vadd.f32 %v177, %v178
    %s180 = sld [smem:[#allocation2]]
    %v181 = vstv %s180
    %v182 = vadd.f32 %v179, %v181
    %v183 = vxor.u32 %v182, 2147483648
    %v184 = vmul.f32 %v183, 1.442695
    %v185 = vpow.pop %v184
    %v186 = vadd.f32 %v185, 1.0
    %v187 = vrcp.pop %v186
    %v188 = vmul.f32 1.0, %v187
    %189 = vst [vmem:[#allocation8] sm:$0x1] %v188
    // Predicated region
    $region26: #{tpu_custom_call.1} parent=1 // pred_check
      _
    $region27: #{tpu_custom_call.1} parent=1 // pred_check_branch
      %191 = sbr.rel (0) target = $region29
    $region28: #{tpu_custom_call.1} parent=1 // pred_region
      %s193 = ssub.s32 16, 16
      %194 = vsyncadd [#allocation5], %s193
      %s196 = sshll.u32 [#allocation8], 4
      %s197 = int_to_ptr.vmem [resolvable:$true] %s196
      %199 = dma.vmem_to_hbm [thread:$0]  %s197, 16, %s4, [#allocation5]
    $region29: #{tpu_custom_call.1} parent=1 // pred_fallthru
      _
    // Predicated region
    $region30: #{tpu_custom_call.1} parent=1 // pred_check
      _
    $region31: #{tpu_custom_call.1} parent=1 // pred_check_branch
      %201 = sbr.rel (0) target = $region33
    $region32: #{tpu_custom_call.1} parent=1 // pred_region
      %202 = dma.done [#allocation5], 16
    $region33: #{tpu_custom_call.1} parent=1 // pred_fallthru
      _
    %203 = vsyncpa [#allocation4], 1
    %204 = vsyncpa [#allocation7], 1
    %205 = vsyncpa [#allocation5], 1

</llo_original>
